<compile_context>
chip_gen: v6e
topology: v6e:2x2x1
jax: 0.10.0
libtpu: 0.0.40
codegen_flags: <defaults>
</compile_context>

<pallas_src>
import functools

import jax
import jax.numpy as jnp
from jax.experimental import pallas as pl
from jax.experimental.pallas import tpu as pltpu


def _subspace_rotate_kernel(x_ref, w_ref, o_ref):
    # x_ref: (tm, n)      row tile of the flattened input, native x dtype
    # w_ref: (n, m_sub)   weight subspace, resident across the row grid
    # o_ref: (tm, m_sub)  output tile, weight dtype
    x = x_ref[...].astype(w_ref.dtype)       # in-kernel x.to(weight.dtype)
    o_ref[...] = jnp.dot(
        x, w_ref[...], preferred_element_type=jnp.float32
    ).astype(o_ref.dtype)


def _round_up(a, b):
    return ((a + b - 1) // b) * b


def _sublane_align(dtype):
    # minimum sublane multiple for the second-to-last block dim
    return {4: 8, 2: 16, 1: 32}.get(jnp.dtype(dtype).itemsize, 8)


def _vmem_capacity_bytes():
    try:
        cap = getattr(pltpu.get_tpu_info(), "vmem_capacity_bytes", None)
        if cap:
            return int(cap)
    except Exception:
        pass
    return 64 << 20          # conservative fallback: v7x per-TensorCore VMEM


def _plan_tiles(M, n, m_sub, x_dtype, w_dtype, tm=None):
    """Pick the row tile `tm` and a scoped-VMEM limit from lane-padded footprints."""
    x_bytes = jnp.dtype(x_dtype).itemsize
    w_bytes = jnp.dtype(w_dtype).itemsize
    align = max(_sublane_align(x_dtype), _sublane_align(w_dtype))

    # True (8,128)-padded VMEM cost of each buffer.
    x_row = _round_up(n, 128) * x_bytes                      # one x-tile row
    o_row = _round_up(m_sub, 128) * w_bytes                  # one output-tile row
    w_foot = (2 * _round_up(n, _sublane_align(w_dtype))      # x2 for safety even
              * _round_up(m_sub, 128) * w_bytes)             # though single-buffered

    vmem_cap = _vmem_capacity_bytes()
    small_vmem = vmem_cap <= (64 << 20)                      # v7x-class part
    headroom = (12 << 20) if small_vmem else (16 << 20)
    per_x_buf_cap = (16 << 20) if small_vmem else (24 << 20)

    if tm is None:
        avail = max(vmem_cap - headroom - w_foot, 4 << 20)
        tm_avail = avail // (2 * (x_row + o_row))            # x + out, double-buffered
        tm_cap = per_x_buf_cap // max(1, x_row)
        tm = max(align, (min(tm_avail, tm_cap) // align) * align)

        # Clamp to the problem size; keep >=2 grid steps whenever possible so
        # the "parallel" row axis shards across both TensorCores on v7x.
        tm_needed = _round_up(max(M, 1), align)
        if tm >= tm_needed:
            tm = _round_up(pl.cdiv(M, 2), align) if M >= 2 * align else tm_needed
    else:
        tm = max(align, _round_up(tm, align))

    vmem_need = 2 * tm * x_row + 2 * tm * o_row + w_foot
    vmem_limit = int(min(max(vmem_need * 5 // 4 + (4 << 20), 32 << 20),
                         vmem_cap - (8 << 20)))
    vmem_limit = max(vmem_limit, vmem_need)                  # never below true footprint
    return tm, vmem_limit


def _weight_spec(n, m_sub):
    # Constant index_map -> fetched once; request single buffering to reclaim
    # VMEM for a larger x tile (most valuable on v7x's 64 MiB VMEM).
    try:
        return pl.BlockSpec((n, m_sub), lambda i: (0, 0),
                            pipeline_mode=pl.Buffered(1))
    except (TypeError, ValueError):
        return pl.BlockSpec((n, m_sub), lambda i: (0, 0))


@functools.partial(jax.jit, static_argnames=("l", "r", "tm"))
def subspace_low_rank_rotate(x, weight, *, l, r, tm=None):
    """y = x.astype(weight.dtype) @ weight[:, l:r], matmul in a Pallas kernel.

    x      : (..., n)   any leading batch dims, any float dtype
    weight : (n, m)
    l, r   : static Python ints selecting the column subspace [l, r)
    returns: (..., r - l) in weight.dtype
    """
    n, m = weight.shape
    assert x.shape[-1] == n, f"feature dim mismatch: {x.shape[-1]} vs {n}"
    assert 0 <= l < r <= m, f"invalid subspace [{l}, {r}) for m={m}"
    m_sub = r - l
    w_sub = weight[:, l:r]                    # static subspace slice

    lead = x.shape[:-1]
    x2 = x.reshape(-1, n)                     # keep native dtype; cast in-kernel
    M = x2.shape[0]

    tm, vmem_limit = _plan_tiles(M, n, m_sub, x2.dtype, w_sub.dtype, tm=tm)
    grid = (pl.cdiv(M, tm),)                  # ragged last block: masked by Pallas

    x_bytes = jnp.dtype(x2.dtype).itemsize
    w_bytes = jnp.dtype(w_sub.dtype).itemsize
    cost = pl.CostEstimate(
        flops=2 * M * n * m_sub,
        transcendentals=0,
        bytes_accessed=M * n * x_bytes + n * m_sub * w_bytes + M * m_sub * w_bytes,
    )

    out = pl.pallas_call(
        _subspace_rotate_kernel,
        out_shape=jax.ShapeDtypeStruct((M, m_sub), w_sub.dtype),
        grid_spec=pltpu.PrefetchScalarGridSpec(
            num_scalar_prefetch=0,
            grid=grid,
            in_specs=[
                pl.BlockSpec((tm, n), lambda i: (i, 0)),   # row tile of x
                _weight_spec(n, m_sub),                    # resident weight subspace
            ],
            out_specs=pl.BlockSpec((tm, m_sub), lambda i: (i, 0)),
        ),
        compiler_params=pltpu.CompilerParams(
            dimension_semantics=("parallel",),
            vmem_limit_bytes=vmem_limit,
        ),
        cost_estimate=cost,
    )(x2, w_sub)

    return out.reshape(*lead, m_sub)


def orthogonal_init(key, n, m, dtype=jnp.float32):
    """Deterministic equivalent of torch.nn.init.orthogonal_ for an (n, m) matrix."""
    big = max(n, m)
    a = jax.random.normal(key, (big, min(n, m)), dtype=jnp.float32)
    q, r = jnp.linalg.qr(a)
    q = q * jnp.sign(jnp.diagonal(r))[None, :]   # sign correction (as torch does)
    w = q[:n, :m] if n >= m else q[:m, :n].T
    return w.astype(dtype)


if __name__ == "__main__":
    key = jax.random.PRNGKey(0)
    k_w, k_x = jax.random.split(key)

    # Module shapes: weight (n, m); forward uses the column subspace [l, r).
    n, m = 32, 8
    batch, seq = 2, 9          # x: (2, 9, 32) -> 18 flattened rows (ragged grid)
    l, r = 2, 6                # 4-column subspace

    weight = orthogonal_init(k_w, n, m, dtype=jnp.float32)
    x = jax.random.normal(k_x, (batch, seq, n), dtype=jnp.float32)

    y = subspace_low_rank_rotate(x, weight, l=l, r=r)
    jax.block_until_ready(y)

    # Correctness check against plain JAX reference.
    y_ref = jnp.einsum("bsn,nk->bsk", x.astype(weight.dtype), weight[:, l:r])
    assert y.shape == (batch, seq, r - l)
    assert jnp.allclose(y, y_ref, atol=1e-5, rtol=1e-5)

    print("KERNEL_OK")
</pallas_src>

<mosaic_0001>
module attributes {stable_mosaic.version = 11 : i64} {
  func.func @_subspace_rotate_kernel(%arg0: i32, %arg1: memref<16x32xf32, #tpu.memory_space<vmem>>, %arg2: memref<32x4xf32, #tpu.memory_space<vmem>>, %arg3: memref<16x4xf32, #tpu.memory_space<vmem>>) attributes {dimension_semantics = [#tpu.dimension_semantics<parallel>], iteration_bounds = array<i64: 2>, scalar_prefetch = 0 : i64, scratch_operands = 0 : i64, tpu.core_type = #tpu.core_type<tc>, window_params = [{transform_indices = @transform_0, window_bounds = array<i64: 16, 32>}, {pipeline_mode = #tpu.pipeline_mode<synchronous>, transform_indices = @transform_1, window_bounds = array<i64: 32, 4>}, {transform_indices = @transform_2, window_bounds = array<i64: 16, 4>}]} {
    %c0 = arith.constant 0 : index
    %c0_0 = arith.constant 0 : index
    %0 = vector.load %arg1[%c0, %c0_0] : memref<16x32xf32, #tpu.memory_space<vmem>>, vector<16x32xf32>
    %c0_1 = arith.constant 0 : index
    %c0_2 = arith.constant 0 : index
    %1 = vector.load %arg2[%c0_1, %c0_2] : memref<32x4xf32, #tpu.memory_space<vmem>>, vector<32x4xf32>
    %cst = arith.constant dense<0.000000e+00> : vector<16x4xf32>
    %2 = tpu.matmul %0, %1, %cst {dimension_numbers = #tpu.dot_dimension_numbers<[1], [0], [0], [1], [0, 0, 1, 1], [], []>} : vector<16x32xf32>, vector<32x4xf32>, vector<16x4xf32> -> vector<16x4xf32>
    %c0_3 = arith.constant 0 : index
    %c0_4 = arith.constant 0 : index
    %3 = vector.load %arg3[%c0_3, %c0_4] : memref<16x4xf32, #tpu.memory_space<vmem>>, vector<16x4xf32>
    tpu.vector_store %arg3[%c0_3, %c0_4], %2 {strides = array<i32>} : memref<16x4xf32, #tpu.memory_space<vmem>>, vector<16x4xf32>,
    return
  }
  func.func @transform_0(%arg0: i32) -> (i32, i32) {
    %c0_i32 = arith.constant 0 : i32
    %c0_i32_0 = arith.constant 0 : i32
    return %arg0, %c0_i32 : i32, i32
  }
  func.func @transform_1(%arg0: i32) -> (i32, i32) {
    %c0_i32 = arith.constant 0 : i32
    %c0_i32_0 = arith.constant 0 : i32
    %c0_i32_1 = arith.constant 0 : i32
    return %c0_i32, %c0_i32_0 : i32, i32
  }
  func.func @transform_2(%arg0: i32) -> (i32, i32) {
    %c0_i32 = arith.constant 0 : i32
    %c0_i32_0 = arith.constant 0 : i32
    return %arg0, %c0_i32 : i32, i32
  }
}

</mosaic_0001>

<llo_original>
// kernel: subspace_low_rank_rotate.1
$region0: #{subspace_low_rank_rotate.1}
  #allocation0 [shape = 'u32[]', space=smem, size = 0x4, offset = 0x4, fixed_abs, tag = 'smem constant byte address 0x4 - core index']
  #allocation1 [shape = 'u32[144,128]{1,0:T(1,128)}', space=vmem, size = 0x12000, scoped, tag = 'internal scratch']
  %s0 = inlined_call_operand.vmem [shape: f32[18,32], index: 0, kind: input, shape index: {}]
  %s1 = inlined_call_operand.vmem [shape: f32[32,4], index: 1, kind: input, shape index: {}]
  %s2 = inlined_call_operand.vmem [shape: f32[18,4], index: 2, kind: output, shape index: {}]
  %s3 = sld [smem:[#allocation0]]
  $region89: #{subspace_low_rank_rotate.1} parent=0
    _
  %s5 = ssub.s32 1, %s3
  %s6 = scalar_select 0, %s5, %s3
  $region1: #{subspace_low_rank_rotate.1} parent=0
    #allocation2 [shape = 'u8[16384]{0}', space=vmem, size = 0x4000, scoped, tag = 'output window, operand 0']
    loop: start=0, step=1, limit=4
    $region2: #{subspace_low_rank_rotate.1} parent=1 // loop_pre_header
      _
    $region3: #{subspace_low_rank_rotate.1} parent=1 // loop_header
      %s8 = sphi 0, %s12
      %p9 = scmp.ge.s32.totalorder %s8, 4
      %s18 = sphi 0, %s20
      %s21 = sphi 0, %s18
      %s22 = sphi 0, %s21
      %s38 = sphi 0, %s22
      %s42 = sphi 0, %s42
      %s44 = sphi 0, %s42
      %s45 = sphi 0, %s44
      %s59 = sphi 0, %s45
      %s65 = sphi 0, %s67
      %s68 = sphi 0, %s65
      %s69 = sphi 0, %s68
      %s85 = sphi 0, %s69
    $region4: #{subspace_low_rank_rotate.1} parent=1 // loop_header_branch
      %11 = sbr.rel (%p9) target = $region8
    $region5: #{subspace_low_rank_rotate.1} parent=1 // loop_body
      %s13 = ssub.s32 %s8, 1
      %s14 = ssub.s32 %s8, 2
      %s15 = sadd.s32 %s8, 1
      %s16 = ssub.s32 %s8, %s15
      %p17 = scmp.eq.s32.totalorder %s16, 0
      %s19 = sadd.s32 %s18, 1
      %s20 = scalar_select %p17, %s18, %s19
      %p23 = pneg %p17
      %p24 = scmp.eq.s32.totalorder %s8, 1
      %p25 = por %p23, %p24
      %p26 = scmp.ne.s32.totalorder %s18, %s21
      %p27 = scmp.eq.s32.totalorder %s8, 0
      %p28 = por %p26, %p27
      %p29 = scmp.ne.s32.totalorder %s18, %s21
      %p30 = scmp.eq.s32.totalorder %s13, 1
      %p31 = por %p29, %p30
      %p32 = scmp.ne.s32.totalorder %s21, %s22
      %p33 = scmp.eq.s32.totalorder %s13, 0
      %p34 = por %p32, %p33
      %p35 = scmp.ne.s32.totalorder %s21, %s22
      %p36 = scmp.eq.s32.totalorder %s14, 1
      %p37 = por %p35, %p36
      %p39 = scmp.ne.s32.totalorder %s22, %s38
      %p40 = scmp.eq.s32.totalorder %s14, 0
      %p41 = por %p39, %p40
      %s43 = sadd.s32 %s42, 1
      %p46 = scmp.eq.s32.totalorder %s8, 1
      %p47 = scmp.ne.s32.totalorder %s42, %s44
      %p48 = scmp.eq.s32.totalorder %s8, 0
      %p49 = por %p47, %p48
      %p50 = scmp.ne.s32.totalorder %s42, %s44
      %p51 = scmp.eq.s32.totalorder %s13, 1
      %p52 = por %p50, %p51
      %p53 = scmp.ne.s32.totalorder %s44, %s45
      %p54 = scmp.eq.s32.totalorder %s13, 0
      %p55 = por %p53, %p54
      %p56 = scmp.ne.s32.totalorder %s44, %s45
      %p57 = scmp.eq.s32.totalorder %s14, 1
      %p58 = por %p56, %p57
      %p60 = scmp.ne.s32.totalorder %s45, %s59
      %p61 = scmp.eq.s32.totalorder %s14, 0
      %p62 = por %p60, %p61
      %s63 = ssub.s32 %s8, %s15
      %p64 = scmp.eq.s32.totalorder %s63, 0
      %s66 = sadd.s32 %s65, 1
      %s67 = scalar_select %p64, %s65, %s66
      %p70 = pneg %p64
      %p71 = scmp.eq.s32.totalorder %s8, 1
      %p72 = por %p70, %p71
      %p73 = scmp.ne.s32.totalorder %s65, %s68
      %p74 = scmp.eq.s32.totalorder %s8, 0
      %p75 = por %p73, %p74
      %p76 = scmp.ne.s32.totalorder %s65, %s68
      %p77 = scmp.eq.s32.totalorder %s13, 1
      %p78 = por %p76, %p77
      %p79 = scmp.ne.s32.totalorder %s68, %s69
      %p80 = scmp.eq.s32.totalorder %s13, 0
      %p81 = por %p79, %p80
      %p82 = scmp.ne.s32.totalorder %s68, %s69
      %p83 = scmp.eq.s32.totalorder %s14, 1
      %p84 = por %p82, %p83
      %p86 = scmp.ne.s32.totalorder %s69, %s85
      %p87 = scmp.eq.s32.totalorder %s14, 0
      %p88 = por %p86, %p87
      %p89 = scmp.le.s32.totalorder 1, %s8
      %p90 = scmp.lt.s32.totalorder %s8, 3
      %p91 = pnand %p89, %p90
      %p92 = pneg %p91
      // Predicated region
      $region9: #{subspace_low_rank_rotate.1} parent=5 // pred_check
        _
      $region10: #{subspace_low_rank_rotate.1} parent=5 // pred_check_branch
        %94 = sbr.rel (%p91) target = $region12
      $region11: #{subspace_low_rank_rotate.1} parent=5 // pred_region
        %s95 = ssub.s32 %s8, 1
        // Predicated region
        $region13: #{subspace_low_rank_rotate.1} parent=11 // pred_check
          %p96 = pneg %p55
        $region14: #{subspace_low_rank_rotate.1} parent=11 // pred_check_branch
          %98 = sbr.rel (%p96) target = $region16
        $region15: #{subspace_low_rank_rotate.1} parent=11 // pred_region
          _
        $region16: #{subspace_low_rank_rotate.1} parent=11 // pred_fallthru
          _
      $region12: #{subspace_low_rank_rotate.1} parent=5 // pred_fallthru
        _
      %p99 = scmp.lt.s32.totalorder %s8, 2
      // Predicated region
      $region17: #{subspace_low_rank_rotate.1} parent=5 // pred_check
        %p100 = pneg %p99
      $region18: #{subspace_low_rank_rotate.1} parent=5 // pred_check_branch
        %102 = sbr.rel (%p100) target = $region20
      $region19: #{subspace_low_rank_rotate.1} parent=5 // pred_region
        // Predicated region
        $region21: #{subspace_low_rank_rotate.1} parent=19 // pred_check
          %p103 = pneg %p28
        $region22: #{subspace_low_rank_rotate.1} parent=19 // pred_check_branch
          %105 = sbr.rel (%p103) target = $region24
        $region23: #{subspace_low_rank_rotate.1} parent=19 // pred_region
          %s106 = smul.u32 2, %s8
          %s107 = ssub.s32 3, %s106
          %p108 = scmp.lt.s32.totalorder %s107, 2
          %s109 = scalar_select %p108, %s107, 2
          %s110 = smul.u32 128, %s109
          %p111 = scmp.lt.s32.totalorder %s106, 2
          %s112 = scalar_select %p111, %s106, 2
          %s113 = smul.addr %s112, 8
          %s114 = scalar_lea.vmem %s0, %s113
          %s115 = smul.u32 2, %s8
          %s116 = ssub.s32 3, %s115
          %p117 = scmp.lt.s32.totalorder %s116, 2
          %s118 = scalar_select %p117, %s116, 2
          %s119 = smul.u32 128, %s118
        $region24: #{subspace_low_rank_rotate.1} parent=19 // pred_fallthru
          _
      $region20: #{subspace_low_rank_rotate.1} parent=5 // pred_fallthru
        _
      %p120 = scmp.le.s32.totalorder 1, %s8
      %p121 = scmp.lt.s32.totalorder %s8, 3
      %p122 = pnand %p120, %p121
      %p123 = pneg %p122
      // Predicated region
      $region25: #{subspace_low_rank_rotate.1} parent=5 // pred_check
        _
      $region26: #{subspace_low_rank_rotate.1} parent=5 // pred_check_branch
        %125 = sbr.rel (%p122) target = $region28
      $region27: #{subspace_low_rank_rotate.1} parent=5 // pred_region
        %s126 = ssub.s32 %s8, 1
        %s127 = smul.u32 2, %s13
        %s128 = ssub.s32 3, %s127
        %p129 = scmp.lt.s32.totalorder %s128, 2
        %s130 = scalar_select %p129, %s128, 2
        %s131 = smul.u32 128, %s130
        %p132 = scmp.lt.s32.totalorder %s127, 2
        %s133 = scalar_select %p132, %s127, 2
        %s134 = smul.addr %s133, 8
        %s135 = scalar_lea.vmem %s0, %s134
        %p136 = pneg %p34
        %p137 = pneg %p31
        %p138 = pneg %p55
        %p139 = pneg %p52
        %p140 = pneg %p81
        %p141 = pneg %p78
        %s142 = sand.u32 %s68, 1
        %s143 = sand.u32 %s68, 1
        %s144 = smul.addr %s143, 16
        %s145 = scalar_lea.vmem [#allocation2], %s144
        %s146 = smul.u32 2, %s13
        %s147 = ssub.s32 3, %s146
        %p148 = scmp.lt.s32.totalorder %s147, 2
        %s149 = scalar_select %p148, %s147, 2
        %s150 = smul.u32 128, %s149
        %p151 = scmp.lt.s32.totalorder %s146, 2
        %s152 = scalar_select %p151, %s146, 2
        %s153 = smul.addr %s152, 8
        %s154 = scalar_lea.vmem %s0, %s153
        %s155 = smul.u32 2, %s13
        %s156 = ssub.s32 3, %s155
        %p157 = scmp.lt.s32.totalorder %s156, 2
        %s158 = scalar_select %p157, %s156, 2
        %s159 = smul.u32 128, %s158
        %s160 = smul.u32 2, %s13
        %s161 = ssub.s32 3, %s160
        %p162 = scmp.lt.s32.totalorder %s161, 2
        %s163 = scalar_select %p162, %s161, 2
        %s164 = smul.u32 128, %s163
        %v165 = vld [vmem:[%s154] sm:$0xff]
        %v166 = vld [vmem:[%s154 + $0x8] sm:$0xff]
        %v167 = vld [vmem:[%s1] sm:$0xff]
        %v168 = vld [vmem:[%s1 + $0x8] sm:$0xff]
        %v169 = vld [vmem:[%s1 + $0x10] sm:$0xff]
        %v170 = vld [vmem:[%s1 + $0x18] sm:$0xff]
        %vm171 = vcmask 261120
        %v173 = vsel %vm171, %v165, 0
        %v176 = vsel %vm171, %v166, 0
        %178 = vmatprep.subr.mxu0 0.0
        %179 = vmatpush1.msra.mxu0 0.0
        %180 = vmatprep.subr.mxu0 0.0
        %181 = vmatpush1.msra.mxu0 0.0
        %182 = vmatprep.subr.mxu0 0.0
        %183 = vmatpush1.msra.mxu0 0.0
        %184 = vmatprep.subr.mxu0 0.0
        %185 = vmatpush1.msra.mxu0 0.0
        %186 = vmatprep.subr.mxu0 0.0
        %187 = vmatpush1.msra.mxu0 0.0
        %188 = vmatprep.subr.mxu0 0.0
        %189 = vmatpush1.msra.mxu0 0.0
        %190 = vmatprep.subr.mxu0 0.0
        %191 = vmatpush1.msra.mxu0 0.0
        %192 = vmatprep.subr.mxu0 0.0
        %193 = vmatpush1.msra.mxu0 0.0
        %194 = vmatprep.subr.mxu0 0.0
        %195 = vmatpush1.msra.mxu0 0.0
        %196 = vmatprep.subr.mxu0 0.0
        %197 = vmatpush1.msra.mxu0 0.0
        %198 = vmatprep.subr.mxu0 0.0
        %199 = vmatpush1.msra.mxu0 0.0
        %200 = vmatprep.subr.mxu0 0.0
        %201 = vmatpush1.msra.mxu0 0.0
        %202 = vmatprep.subr.mxu0 0.0
        %203 = vmatpush1.msra.mxu0 %v170
        %204 = vmatprep.subr.mxu0 0.0
        %205 = vmatpush1.msra.mxu0 %v169
        %206 = vmatprep.subr.mxu0 0.0
        %207 = vmatpush1.msra.mxu0 %v168
        %208 = vmatprep.subr.mxu0 0.0
        %209 = vmatpush1.msra.mxu0 %v167
        %210 = vmatprep.subr.mxu0 0.0
        %211 = vmatpush2.msra.mxu0 0.0
        %212 = vmatprep.subr.mxu0 0.0
        %213 = vmatpush2.msra.mxu0 0.0
        %214 = vmatprep.subr.mxu0 0.0
        %215 = vmatpush2.msra.mxu0 0.0
        %216 = vmatprep.subr.mxu0 0.0
        %217 = vmatpush2.msra.mxu0 0.0
        %218 = vmatprep.subr.mxu0 0.0
        %219 = vmatpush2.msra.mxu0 0.0
        %220 = vmatprep.subr.mxu0 0.0
        %221 = vmatpush2.msra.mxu0 0.0
        %222 = vmatprep.subr.mxu0 0.0
        %223 = vmatpush2.msra.mxu0 0.0
        %224 = vmatprep.subr.mxu0 0.0
        %225 = vmatpush2.msra.mxu0 0.0
        %226 = vmatprep.subr.mxu0 0.0
        %227 = vmatpush2.msra.mxu0 0.0
        %228 = vmatprep.subr.mxu0 0.0
        %229 = vmatpush2.msra.mxu0 0.0
        %230 = vmatprep.subr.mxu0 0.0
        %231 = vmatpush2.msra.mxu0 0.0
        %232 = vmatprep.subr.mxu0 0.0
        %233 = vmatpush2.msra.mxu0 0.0
        %234 = vmatprep.subr.mxu0 0.0
        %235 = vmatpush2.msra.mxu0 0.0
        %236 = vmatprep.subr.mxu0 0.0
        %237 = vmatpush2.msra.mxu0 0.0
        %238 = vmatprep.subr.mxu0 0.0
        %239 = vmatpush2.msra.mxu0 0.0
        %240 = vmatprep.subr.mxu0 0.0
        %241 = vmatpush2.msra.mxu0 0.0
        %242 = vmatprep.mubr.f32.mxu0 0.0
        %243 = vmatmul.mubr.f32.gmra.mxu0 %v173
        %v244 = vpop.f32.mrf.mxu0
        %v245 = vadd.f32 0.0, %v244
        %v246 = vpop.f32.mrf.mxu0
        %247 = vmatprep.mubr.f32.mxu0 0.0
        %248 = vmatmul.mubr.f32.gmra.mxu0 %v176
        %v249 = vpop.f32.mrf.mxu0
        %v250 = vadd.f32 0.0, %v249
        %v251 = vpop.f32.mrf.mxu0
        %252 = vdwg.mxu0
        %vm253 = vcmask 31744
        %254 = vst.msk [vmem:[%s145] sm:$0xff] %vm253, %v245
        %255 = vst.msk [vmem:[%s145 + $0x8] sm:$0xff] %vm253, %v250
        %s256 = sand.u32 %s68, 1
        %s257 = sand.u32 %s68, 1
        %s258 = smul.addr %s257, 16
        %s259 = scalar_lea.vmem [#allocation2], %s258
        // Predicated region
        $region29: #{subspace_low_rank_rotate.1} parent=27 // pred_check
          %p260 = pneg %p78
        $region30: #{subspace_low_rank_rotate.1} parent=27 // pred_check_branch
          %262 = sbr.rel (%p260) target = $region32
        $region31: #{subspace_low_rank_rotate.1} parent=27 // pred_region
          %s263 = smul.u32 2, %s13
          %s264 = ssub.s32 3, %s263
          %p265 = scmp.lt.s32.totalorder %s264, 2
          %s266 = scalar_select %p265, %s264, 2
          %s267 = smul.u32 128, %s266
          %p268 = scmp.ne.s32.totalorder 0, %s267
          %s269 = smul.addr %s263, 8
          %s270 = scalar_lea.vmem %s2, %s269
          // Predicated region
          $region33: #{subspace_low_rank_rotate.1} parent=31 // pred_check
            %p271 = pneg %p268
          $region34: #{subspace_low_rank_rotate.1} parent=31 // pred_check_branch
            %273 = sbr.rel (%p271) target = $region36
          $region35: #{subspace_low_rank_rotate.1} parent=31 // pred_region
            // Predicated region
            $region37: #{subspace_low_rank_rotate.1} parent=35 // pred_check
              _
            $region38: #{subspace_low_rank_rotate.1} parent=35 // pred_check_branch
              %275 = sbr.rel (0) target = $region40
            $region39: #{subspace_low_rank_rotate.1} parent=35 // pred_region
              // Predicated region
              $region59: #{subspace_low_rank_rotate.1} parent=39 // pred_check
                _
              $region60: #{subspace_low_rank_rotate.1} parent=39 // pred_check_branch
                %327 = sbr.rel (0) target = $region62
              $region61: #{subspace_low_rank_rotate.1} parent=39 // pred_region
                %s328 = sshrl.u32 %s266, 1
                // While loop
                $region63: #{subspace_low_rank_rotate.1} parent=61 // loop_pre_header
                  _
                $region64: #{subspace_low_rank_rotate.1} parent=61 // loop_header
                  %s330 = sphi 0, %s332
                  %p331 = scmp.ge.s32.totalorder %s330, %s328
                  %s335 = sphi 0, %s344
                  %s336 = sphi %s259, %s347
                  %s337 = sphi %s270, %s348
                $region65: #{subspace_low_rank_rotate.1} parent=61 // loop_header_branch
                  %334 = sbr.rel (%p331) target = $region69
                $region66: #{subspace_low_rank_rotate.1} parent=61 // loop_body
                  %v338 = vld [vmem:[%s336] sm:$0xff]
                  %339 = vst [vmem:[%s337] sm:$0xff] %v338
                  %v340 = vld [vmem:[%s336 + $0x8] sm:$0xff]
                  %341 = vst [vmem:[%s337 + $0x8] sm:$0xff] %v340
                  %s342 = sadd.s32 1, %s335
                  %p343 = scmp.ge.s32.totalorder %s342, %s328
                  %s344 = scalar_select %p343, 0, %s342
                  %s345 = smul.u32 %s344, 16
                  %s346 = smul.u32 %s344, 16
                  %s347 = scalar_lea.vmem %s259, %s345 [#allocation2]
                  %s348 = scalar_lea.vmem %s270, %s346
                $region67: #{subspace_low_rank_rotate.1} parent=61 // loop_footer
                  %s332 = sadd.s32 %s330, 1
                $region68: #{subspace_low_rank_rotate.1} parent=61 // loop_footer_branch
                  %329 = sbr.rel target = $region64
                $region69: #{subspace_low_rank_rotate.1} parent=61 // loop_exit
                  _
                %s349 = sshrl.u32 %s266, 1
                %s350 = sand.u32 %s266, 1
                %s351 = smul.u32 %s349, 2
                %s352 = smul.u32 8, %s351
                %s353 = scalar_lea.vmem %s259, %s352 [#allocation2]
                %s354 = smul.u32 8, %s351
                %s355 = scalar_lea.vmem %s270, %s354
                // While loop
                $region70: #{subspace_low_rank_rotate.1} parent=61 // loop_pre_header
                  _
                $region71: #{subspace_low_rank_rotate.1} parent=61 // loop_header
                  %s357 = sphi 0, %s359
                  %p358 = scmp.ge.s32.totalorder %s357, %s350
                  %s362 = sphi 0, %s369
                  %s363 = sphi %s353, %s372
                  %s364 = sphi %s355, %s373
                $region72: #{subspace_low_rank_rotate.1} parent=61 // loop_header_branch
                  %361 = sbr.rel (%p358) target = $region76
                $region73: #{subspace_low_rank_rotate.1} parent=61 // loop_body
                  %v365 = vld [vmem:[%s363] sm:$0xff]
                  %366 = vst [vmem:[%s364] sm:$0xff] %v365
                  %s367 = sadd.s32 1, %s362
                  %p368 = scmp.ge.s32.totalorder %s367, %s350
                  %s369 = scalar_select %p368, 0, %s367
                  %s370 = smul.u32 %s369, 8
                  %s371 = smul.u32 %s369, 8
                  %s372 = scalar_lea.vmem %s353, %s370 [#allocation2]
                  %s373 = scalar_lea.vmem %s355, %s371
                $region74: #{subspace_low_rank_rotate.1} parent=61 // loop_footer
                  %s359 = sadd.s32 %s357, 1
                $region75: #{subspace_low_rank_rotate.1} parent=61 // loop_footer_branch
                  %356 = sbr.rel target = $region71
                $region76: #{subspace_low_rank_rotate.1} parent=61 // loop_exit
                  _
              $region62: #{subspace_low_rank_rotate.1} parent=39 // pred_fallthru
                _
              // Predicated region
              $region77: #{subspace_low_rank_rotate.1} parent=39 // pred_check
                _
              $region78: #{subspace_low_rank_rotate.1} parent=39 // pred_check_branch
                %375 = sbr.rel target = $region80
              $region79: #{subspace_low_rank_rotate.1} parent=39 // pred_region
                _
              $region80: #{subspace_low_rank_rotate.1} parent=39 // pred_fallthru
                _
            $region40: #{subspace_low_rank_rotate.1} parent=35 // pred_fallthru
              _
            // Predicated region
            $region41: #{subspace_low_rank_rotate.1} parent=35 // pred_check
              _
            $region42: #{subspace_low_rank_rotate.1} parent=35 // pred_check_branch
              %277 = sbr.rel target = $region44
            $region43: #{subspace_low_rank_rotate.1} parent=35 // pred_region
              %s279 = ssub.s32 256, 1
              %s280 = sshrl.u32 %s266, 1
              // While loop
              $region45: #{subspace_low_rank_rotate.1} parent=43 // loop_pre_header
                _
              $region46: #{subspace_low_rank_rotate.1} parent=43 // loop_header
                %s282 = sphi 0, %s284
                %p283 = scmp.ge.s32.totalorder %s282, %s280
                %s287 = sphi 0, %s296
                %s288 = sphi %s259, %s299
                %s289 = sphi %s270, %s300
              $region47: #{subspace_low_rank_rotate.1} parent=43 // loop_header_branch
                %286 = sbr.rel (%p283) target = $region51
              $region48: #{subspace_low_rank_rotate.1} parent=43 // loop_body
                %v290 = vld [vmem:[%s288] sm:%s279]
                %291 = vst [vmem:[%s289] sm:%s279] %v290
                %v292 = vld [vmem:[%s288 + $0x8] sm:%s279]
                %293 = vst [vmem:[%s289 + $0x8] sm:%s279] %v292
                %s294 = sadd.s32 1, %s287
                %p295 = scmp.ge.s32.totalorder %s294, %s280
                %s296 = scalar_select %p295, 0, %s294
                %s297 = smul.u32 %s296, 16
                %s298 = smul.u32 %s296, 16
                %s299 = scalar_lea.vmem %s259, %s297 [#allocation2]
                %s300 = scalar_lea.vmem %s270, %s298
              $region49: #{subspace_low_rank_rotate.1} parent=43 // loop_footer
                %s284 = sadd.s32 %s282, 1
              $region50: #{subspace_low_rank_rotate.1} parent=43 // loop_footer_branch
                %281 = sbr.rel target = $region46
              $region51: #{subspace_low_rank_rotate.1} parent=43 // loop_exit
                _
              %s301 = sshrl.u32 %s266, 1
              %s302 = sand.u32 %s266, 1
              %s303 = smul.u32 %s301, 2
              %s304 = smul.u32 8, %s303
              %s305 = scalar_lea.vmem %s259, %s304 [#allocation2]
              %s306 = smul.u32 8, %s303
              %s307 = scalar_lea.vmem %s270, %s306
              // While loop
              $region52: #{subspace_low_rank_rotate.1} parent=43 // loop_pre_header
                _
              $region53: #{subspace_low_rank_rotate.1} parent=43 // loop_header
                %s309 = sphi 0, %s311
                %p310 = scmp.ge.s32.totalorder %s309, %s302
                %s314 = sphi 0, %s321
                %s315 = sphi %s305, %s324
                %s316 = sphi %s307, %s325
              $region54: #{subspace_low_rank_rotate.1} parent=43 // loop_header_branch
                %313 = sbr.rel (%p310) target = $region58
              $region55: #{subspace_low_rank_rotate.1} parent=43 // loop_body
                %v317 = vld [vmem:[%s315] sm:%s279]
                %318 = vst [vmem:[%s316] sm:%s279] %v317
                %s319 = sadd.s32 1, %s314
                %p320 = scmp.ge.s32.totalorder %s319, %s302
                %s321 = scalar_select %p320, 0, %s319
                %s322 = smul.u32 %s321, 8
                %s323 = smul.u32 %s321, 8
                %s324 = scalar_lea.vmem %s305, %s322 [#allocation2]
                %s325 = scalar_lea.vmem %s307, %s323
              $region56: #{subspace_low_rank_rotate.1} parent=43 // loop_footer
                %s311 = sadd.s32 %s309, 1
              $region57: #{subspace_low_rank_rotate.1} parent=43 // loop_footer_branch
                %308 = sbr.rel target = $region53
              $region58: #{subspace_low_rank_rotate.1} parent=43 // loop_exit
                _
            $region44: #{subspace_low_rank_rotate.1} parent=35 // pred_fallthru
              _
          $region36: #{subspace_low_rank_rotate.1} parent=31 // pred_fallthru
            _
          %376 = vnop
        $region32: #{subspace_low_rank_rotate.1} parent=27 // pred_fallthru
          _
      $region28: #{subspace_low_rank_rotate.1} parent=5 // pred_fallthru
        _
      %p377 = scmp.le.s32.totalorder 2, %s8
      // Predicated region
      $region81: #{subspace_low_rank_rotate.1} parent=5 // pred_check
        %p378 = pneg %p377
      $region82: #{subspace_low_rank_rotate.1} parent=5 // pred_check_branch
        %380 = sbr.rel (%p378) target = $region84
      $region83: #{subspace_low_rank_rotate.1} parent=5 // pred_region
        %s381 = ssub.s32 %s8, 2
        // Predicated region
        $region85: #{subspace_low_rank_rotate.1} parent=83 // pred_check
          %p382 = pneg %p84
        $region86: #{subspace_low_rank_rotate.1} parent=83 // pred_check_branch
          %384 = sbr.rel (%p382) target = $region88
        $region87: #{subspace_low_rank_rotate.1} parent=83 // pred_region
          %s385 = sand.u32 %s69, 1
          %s386 = sand.u32 %s69, 1
          %s387 = smul.addr %s386, 16
          %s388 = scalar_lea.vmem [#allocation2], %s387
        $region88: #{subspace_low_rank_rotate.1} parent=83 // pred_fallthru
          _
      $region84: #{subspace_low_rank_rotate.1} parent=5 // pred_fallthru
        _
    $region6: #{subspace_low_rank_rotate.1} parent=1 // loop_footer
      %s12 = sadd.s32 1, %s8
    $region7: #{subspace_low_rank_rotate.1} parent=1 // loop_footer_branch
      %7 = sbr.rel target = $region3
    $region8: #{subspace_low_rank_rotate.1} parent=1 // loop_exit
      _

</llo_original>
